<compile_context>
chip_gen: v5e
topology: v5e:2x2
jax: 0.10.0
libtpu: 0.0.40
codegen_flags: <defaults>
</compile_context>

<pallas_src>
import functools

import jax
import jax.numpy as jnp
from jax.experimental import pallas as pl
from jax.experimental.pallas import tpu as pltpu

EPS = 1e-5
LANE = 128
SUBLANE = 8


def _round_up(x, m):
    return (x + m - 1) // m * m


def _res_blocks_kernel(x_ref, w_ref, g_ref, beta_ref, o_ref, *, n_actual):
    """Fused 2x res_block forward.

    x_ref    : (Np, Fp) f32   zero-padded activations
    w_ref    : (4, Fp, Fp) bf16  pre-transposed, zero-padded weights (y = x @ W)
    g_ref    : (4, 1, Fp) f32  BN gammas (padded cols = 1)
    beta_ref : (4, 1, Fp) f32  BN betas  (padded cols = 0)
    o_ref    : (Np, Fp)        output
    Layer order: [blk1.lin1, blk1.lin2, blk2.lin1, blk2.lin2]
    """
    np_rows = x_ref.shape[0]
    inv_n = jnp.float32(1.0 / n_actual)

    # Row mask keeps padded batch rows exactly zero so they never leak into the
    # next layer's batch statistics (zero rows contribute 0 to sum / sumsq).
    row_ids = jax.lax.broadcasted_iota(jnp.int32, (np_rows, 1), 0)
    row_mask = (row_ids < n_actual).astype(jnp.float32)

    def linear(y, idx):
        # bf16 operands into the MXU, f32 accumulation.  No bias: it is
        # cancelled exactly by the following BN mean subtraction.
        return jnp.dot(y.astype(jnp.bfloat16), w_ref[idx],
                       preferred_element_type=jnp.float32)

    def bn_fused(y, idx, residual=None):
        # One sweep: sum and sum-of-squares -> scale/shift, ReLU (+res) folded.
        mean = jnp.sum(y, axis=0, keepdims=True) * inv_n          # (1, Fp)
        ex2 = jnp.sum(y * y, axis=0, keepdims=True) * inv_n       # (1, Fp)
        var = jnp.maximum(ex2 - mean * mean, 0.0)                 # f32, clamped
        scale = g_ref[idx] * jax.lax.rsqrt(var + EPS)
        shift = beta_ref[idx] - mean * scale
        out = y * scale + shift
        if residual is not None:
            out = out + residual
        return jnp.maximum(out, 0.0) * row_mask

    h = x_ref[...].astype(jnp.float32)
    for blk in range(2):                       # static -> fully unrolled
        res = h
        y = bn_fused(linear(h, 2 * blk), 2 * blk)                     # relu(bn1(lin1))
        h = bn_fused(linear(y, 2 * blk + 1), 2 * blk + 1, residual=res)  # relu(bn2(lin2)+res)

    o_ref[...] = h.astype(o_ref.dtype)


def prepare_params(weights, gammas, betas):
    """One-time parameter prep (outside the per-call hot path).

    weights: (4, F, F) PyTorch layout (out, in); gammas/betas: (4, F).
    Returns transposed, lane-padded bf16 weights and padded f32 BN params.
    Linear biases are intentionally not taken: they are a no-op before
    training-mode BN.
    """
    _, F, _ = weights.shape
    Fp = _round_up(F, LANE)
    pad_f = Fp - F
    w_t = jnp.transpose(weights.astype(jnp.float32), (0, 2, 1))      # y = x @ W
    w_t = jnp.pad(w_t, ((0, 0), (0, pad_f), (0, pad_f))).astype(jnp.bfloat16)
    g = jnp.pad(gammas.astype(jnp.float32), ((0, 0), (0, pad_f)),
                constant_values=1.0).reshape(4, 1, Fp)
    be = jnp.pad(betas.astype(jnp.float32),
                 ((0, 0), (0, pad_f))).reshape(4, 1, Fp)
    return w_t, g, be


@jax.jit
def two_cascaded_res_blocks(x, w_t, g, be):
    """x: (N, F) activations; w_t/g/be from prepare_params()."""
    N, F = x.shape
    Fp = w_t.shape[-1]
    Np = _round_up(max(N, SUBLANE), SUBLANE)

    xp = jnp.pad(x.astype(jnp.float32), ((0, Np - N), (0, Fp - F)))

    # VMEM budget: bf16 weights + BN params + ~8 live (Np,Fp) f32 activation
    # buffers, with 2x margin; never below the 32 MiB default, capped below
    # v7x's 64 MiB physical VMEM.
    w_bytes = 4 * Fp * Fp * 2
    act_bytes = Np * Fp * 4
    param_bytes = 8 * Fp * 4
    vmem_limit = int(min(max(2 * (w_bytes + 8 * act_bytes + param_bytes),
                             32 << 20), 60 << 20))

    full = lambda shape: pl.BlockSpec(shape, lambda: (0,) * len(shape))
    out = pl.pallas_call(
        functools.partial(_res_blocks_kernel, n_actual=N),
        out_shape=jax.ShapeDtypeStruct((Np, Fp), x.dtype),
        grid=(),
        in_specs=[
            full((Np, Fp)),        # activations
            full((4, Fp, Fp)),     # bf16 weights (resident)
            full((4, 1, Fp)),      # gammas
            full((4, 1, Fp)),      # betas
        ],
        out_specs=full((Np, Fp)),
        compiler_params=pltpu.CompilerParams(vmem_limit_bytes=vmem_limit),
    )(xp, w_t, g, be)
    return out[:N, :F]


def _reference(x, weights, biases, gammas, betas):
    """Pure-JAX reference mirroring the PyTorch forward (training-mode BN),
    INCLUDING the linear biases the kernel deliberately drops."""
    def bn(y, g, b):
        mean = jnp.mean(y, axis=0, keepdims=True)
        var = jnp.mean((y - mean) ** 2, axis=0, keepdims=True)
        return (y - mean) / jnp.sqrt(var + EPS) * g + b

    h = x.astype(jnp.float32)
    for blk in range(2):
        res = h
        i1, i2 = 2 * blk, 2 * blk + 1
        y = jnp.maximum(bn(h @ weights[i1].T + biases[i1], gammas[i1], betas[i1]), 0.0)
        y = bn(y @ weights[i2].T + biases[i2], gammas[i2], betas[i2])
        h = jnp.maximum(y + res, 0.0)
    return h


if __name__ == "__main__":
    N, F = 8, 32
    key = jax.random.PRNGKey(0)
    kx, kw, kb, kg, kbe = jax.random.split(key, 5)

    x = jax.random.normal(kx, (N, F), dtype=jnp.float32)
    weights = jax.random.normal(kw, (4, F, F), dtype=jnp.float32) * (1.0 / jnp.sqrt(F))
    biases = jax.random.normal(kb, (4, F), dtype=jnp.float32) * 0.1
    gammas = 1.0 + 0.1 * jax.random.normal(kg, (4, F), dtype=jnp.float32)
    betas = 0.1 * jax.random.normal(kbe, (4, F), dtype=jnp.float32)

    # One-time parameter preparation (transpose + pad + bf16 cast).
    w_t, g, be = prepare_params(weights, gammas, betas)

    out = two_cascaded_res_blocks(x, w_t, g, be)
    out = jax.block_until_ready(out)

    ref = _reference(x, weights, biases, gammas, betas)
    assert out.shape == (N, F)
    # bf16 MXU operands vs. the f32 reference -> modest tolerance.
    assert jnp.allclose(out, ref, atol=1e-1, rtol=1e-1), "mismatch vs reference"

    print("KERNEL_OK")
</pallas_src>

<mosaic_0001>
module attributes {stable_mosaic.version = 11 : i64} {
  func.func @_res_blocks_kernel(%arg0: memref<8x128xf32, #tpu.memory_space<vmem>>, %arg1: memref<4x128x128xbf16, #tpu.memory_space<vmem>>, %arg2: memref<4x1x128xf32, #tpu.memory_space<vmem>>, %arg3: memref<4x1x128xf32, #tpu.memory_space<vmem>>, %arg4: memref<8x128xf32, #tpu.memory_space<vmem>>) attributes {dimension_semantics = [], scalar_prefetch = 0 : i64, scratch_operands = 0 : i64, tpu.core_type = #tpu.core_type<tc>} {
    %0 = tpu.iota {dimensions = array<i32: 0>} : vector<8x1xi32>
    %c8_i32 = arith.constant 8 : i32
    %1 = vector.broadcast %c8_i32 : i32 to vector<8x1xi32>
    %2 = arith.cmpi slt, %0, %1 : vector<8x1xi32>
    %3 = arith.extui %2 : vector<8x1xi1> to vector<8x1xi32>
    %4 = arith.sitofp %3 : vector<8x1xi32> to vector<8x1xf32>
    %c0 = arith.constant 0 : index
    %c0_0 = arith.constant 0 : index
    %5 = vector.load %arg0[%c0, %c0_0] : memref<8x128xf32, #tpu.memory_space<vmem>>, vector<8x128xf32>
    %6 = arith.truncf %5 : vector<8x128xf32> to vector<8x128xbf16>
    %c0_1 = arith.constant 0 : index
    %c0_2 = arith.constant 0 : index
    %c0_3 = arith.constant 0 : index
    %7 = vector.load %arg1[%c0_1, %c0_2, %c0_3] : memref<4x128x128xbf16, #tpu.memory_space<vmem>>, vector<1x128x128xbf16>
    %8 = vector.shape_cast %7 : vector<1x128x128xbf16> to vector<128x128xbf16>
    %cst = arith.constant dense<0.000000e+00> : vector<8x128xf32>
    %9 = tpu.matmul %6, %8, %cst {dimension_numbers = #tpu.dot_dimension_numbers<[1], [0], [0], [1], [0, 0, 1, 1], [], []>} : vector<8x128xbf16>, vector<128x128xbf16>, vector<8x128xf32> -> vector<8x128xf32>
    %cst_4 = arith.constant dense<0.000000e+00> : vector<128xf32>
    %10 = vector.multi_reduction <add>, %9, %cst_4 [0] : vector<8x128xf32> to vector<128xf32>
    %11 = vector.shape_cast %10 : vector<128xf32> to vector<1x128xf32>
    %cst_5 = arith.constant 1.250000e-01 : f32
    %12 = vector.broadcast %cst_5 : f32 to vector<1x128xf32>
    %13 = arith.mulf %11, %12 : vector<1x128xf32>
    %14 = arith.mulf %9, %9 : vector<8x128xf32>
    %cst_6 = arith.constant dense<0.000000e+00> : vector<128xf32>
    %15 = vector.multi_reduction <add>, %14, %cst_6 [0] : vector<8x128xf32> to vector<128xf32>
    %16 = vector.shape_cast %15 : vector<128xf32> to vector<1x128xf32>
    %cst_7 = arith.constant 1.250000e-01 : f32
    %17 = vector.broadcast %cst_7 : f32 to vector<1x128xf32>
    %18 = arith.mulf %16, %17 : vector<1x128xf32>
    %19 = arith.mulf %13, %13 : vector<1x128xf32>
    %20 = arith.subf %18, %19 : vector<1x128xf32>
    %cst_8 = arith.constant 0.000000e+00 : f32
    %21 = vector.broadcast %cst_8 : f32 to vector<1x128xf32>
    %22 = arith.maximumf %20, %21 : vector<1x128xf32>
    %c0_9 = arith.constant 0 : index
    %c0_10 = arith.constant 0 : index
    %c0_11 = arith.constant 0 : index
    %23 = vector.load %arg2[%c0_9, %c0_10, %c0_11] : memref<4x1x128xf32, #tpu.memory_space<vmem>>, vector<1x1x128xf32>
    %24 = vector.shape_cast %23 : vector<1x1x128xf32> to vector<1x128xf32>
    %cst_12 = arith.constant 9.99999974E-6 : f32
    %25 = vector.broadcast %cst_12 : f32 to vector<1x128xf32>
    %26 = arith.addf %22, %25 : vector<1x128xf32>
    %27 = math.rsqrt %26 : vector<1x128xf32>
    %28 = arith.mulf %24, %27 : vector<1x128xf32>
    %c0_13 = arith.constant 0 : index
    %c0_14 = arith.constant 0 : index
    %c0_15 = arith.constant 0 : index
    %29 = vector.load %arg3[%c0_13, %c0_14, %c0_15] : memref<4x1x128xf32, #tpu.memory_space<vmem>>, vector<1x1x128xf32>
    %30 = vector.shape_cast %29 : vector<1x1x128xf32> to vector<1x128xf32>
    %31 = arith.mulf %13, %28 : vector<1x128xf32>
    %32 = arith.subf %30, %31 : vector<1x128xf32>
    %33 = vector.broadcast %28 : vector<1x128xf32> to vector<8x128xf32>
    %34 = arith.mulf %9, %33 : vector<8x128xf32>
    %35 = vector.broadcast %32 : vector<1x128xf32> to vector<8x128xf32>
    %36 = arith.addf %34, %35 : vector<8x128xf32>
    %cst_16 = arith.constant 0.000000e+00 : f32
    %37 = vector.broadcast %cst_16 : f32 to vector<8x128xf32>
    %38 = arith.maximumf %36, %37 : vector<8x128xf32>
    %39 = vector.broadcast %4 : vector<8x1xf32> to vector<8x128xf32>
    %40 = arith.mulf %38, %39 : vector<8x128xf32>
    %41 = arith.truncf %40 : vector<8x128xf32> to vector<8x128xbf16>
    %c1 = arith.constant 1 : index
    %c0_17 = arith.constant 0 : index
    %c0_18 = arith.constant 0 : index
    %42 = vector.load %arg1[%c1, %c0_17, %c0_18] : memref<4x128x128xbf16, #tpu.memory_space<vmem>>, vector<1x128x128xbf16>
    %43 = vector.shape_cast %42 : vector<1x128x128xbf16> to vector<128x128xbf16>
    %cst_19 = arith.constant dense<0.000000e+00> : vector<8x128xf32>
    %44 = tpu.matmul %41, %43, %cst_19 {dimension_numbers = #tpu.dot_dimension_numbers<[1], [0], [0], [1], [0, 0, 1, 1], [], []>} : vector<8x128xbf16>, vector<128x128xbf16>, vector<8x128xf32> -> vector<8x128xf32>
    %cst_20 = arith.constant dense<0.000000e+00> : vector<128xf32>
    %45 = vector.multi_reduction <add>, %44, %cst_20 [0] : vector<8x128xf32> to vector<128xf32>
    %46 = vector.shape_cast %45 : vector<128xf32> to vector<1x128xf32>
    %cst_21 = arith.constant 1.250000e-01 : f32
    %47 = vector.broadcast %cst_21 : f32 to vector<1x128xf32>
    %48 = arith.mulf %46, %47 : vector<1x128xf32>
    %49 = arith.mulf %44, %44 : vector<8x128xf32>
    %cst_22 = arith.constant dense<0.000000e+00> : vector<128xf32>
    %50 = vector.multi_reduction <add>, %49, %cst_22 [0] : vector<8x128xf32> to vector<128xf32>
    %51 = vector.shape_cast %50 : vector<128xf32> to vector<1x128xf32>
    %cst_23 = arith.constant 1.250000e-01 : f32
    %52 = vector.broadcast %cst_23 : f32 to vector<1x128xf32>
    %53 = arith.mulf %51, %52 : vector<1x128xf32>
    %54 = arith.mulf %48, %48 : vector<1x128xf32>
    %55 = arith.subf %53, %54 : vector<1x128xf32>
    %cst_24 = arith.constant 0.000000e+00 : f32
    %56 = vector.broadcast %cst_24 : f32 to vector<1x128xf32>
    %57 = arith.maximumf %55, %56 : vector<1x128xf32>
    %c1_25 = arith.constant 1 : index
    %c0_26 = arith.constant 0 : index
    %c0_27 = arith.constant 0 : index
    %58 = vector.load %arg2[%c1_25, %c0_26, %c0_27] : memref<4x1x128xf32, #tpu.memory_space<vmem>>, vector<1x1x128xf32>
    %59 = vector.shape_cast %58 : vector<1x1x128xf32> to vector<1x128xf32>
    %cst_28 = arith.constant 9.99999974E-6 : f32
    %60 = vector.broadcast %cst_28 : f32 to vector<1x128xf32>
    %61 = arith.addf %57, %60 : vector<1x128xf32>
    %62 = math.rsqrt %61 : vector<1x128xf32>
    %63 = arith.mulf %59, %62 : vector<1x128xf32>
    %c1_29 = arith.constant 1 : index
    %c0_30 = arith.constant 0 : index
    %c0_31 = arith.constant 0 : index
    %64 = vector.load %arg3[%c1_29, %c0_30, %c0_31] : memref<4x1x128xf32, #tpu.memory_space<vmem>>, vector<1x1x128xf32>
    %65 = vector.shape_cast %64 : vector<1x1x128xf32> to vector<1x128xf32>
    %66 = arith.mulf %48, %63 : vector<1x128xf32>
    %67 = arith.subf %65, %66 : vector<1x128xf32>
    %68 = vector.broadcast %63 : vector<1x128xf32> to vector<8x128xf32>
    %69 = arith.mulf %44, %68 : vector<8x128xf32>
    %70 = vector.broadcast %67 : vector<1x128xf32> to vector<8x128xf32>
    %71 = arith.addf %69, %70 : vector<8x128xf32>
    %72 = arith.addf %71, %5 : vector<8x128xf32>
    %cst_32 = arith.constant 0.000000e+00 : f32
    %73 = vector.broadcast %cst_32 : f32 to vector<8x128xf32>
    %74 = arith.maximumf %72, %73 : vector<8x128xf32>
    %75 = vector.broadcast %4 : vector<8x1xf32> to vector<8x128xf32>
    %76 = arith.mulf %74, %75 : vector<8x128xf32>
    %77 = arith.truncf %76 : vector<8x128xf32> to vector<8x128xbf16>
    %c2 = arith.constant 2 : index
    %c0_33 = arith.constant 0 : index
    %c0_34 = arith.constant 0 : index
    %78 = vector.load %arg1[%c2, %c0_33, %c0_34] : memref<4x128x128xbf16, #tpu.memory_space<vmem>>, vector<1x128x128xbf16>
    %79 = vector.shape_cast %78 : vector<1x128x128xbf16> to vector<128x128xbf16>
    %cst_35 = arith.constant dense<0.000000e+00> : vector<8x128xf32>
    %80 = tpu.matmul %77, %79, %cst_35 {dimension_numbers = #tpu.dot_dimension_numbers<[1], [0], [0], [1], [0, 0, 1, 1], [], []>} : vector<8x128xbf16>, vector<128x128xbf16>, vector<8x128xf32> -> vector<8x128xf32>
    %cst_36 = arith.constant dense<0.000000e+00> : vector<128xf32>
    %81 = vector.multi_reduction <add>, %80, %cst_36 [0] : vector<8x128xf32> to vector<128xf32>
    %82 = vector.shape_cast %81 : vector<128xf32> to vector<1x128xf32>
    %cst_37 = arith.constant 1.250000e-01 : f32
    %83 = vector.broadcast %cst_37 : f32 to vector<1x128xf32>
    %84 = arith.mulf %82, %83 : vector<1x128xf32>
    %85 = arith.mulf %80, %80 : vector<8x128xf32>
    %cst_38 = arith.constant dense<0.000000e+00> : vector<128xf32>
    %86 = vector.multi_reduction <add>, %85, %cst_38 [0] : vector<8x128xf32> to vector<128xf32>
    %87 = vector.shape_cast %86 : vector<128xf32> to vector<1x128xf32>
    %cst_39 = arith.constant 1.250000e-01 : f32
    %88 = vector.broadcast %cst_39 : f32 to vector<1x128xf32>
    %89 = arith.mulf %87, %88 : vector<1x128xf32>
    %90 = arith.mulf %84, %84 : vector<1x128xf32>
    %91 = arith.subf %89, %90 : vector<1x128xf32>
    %cst_40 = arith.constant 0.000000e+00 : f32
    %92 = vector.broadcast %cst_40 : f32 to vector<1x128xf32>
    %93 = arith.maximumf %91, %92 : vector<1x128xf32>
    %c2_41 = arith.constant 2 : index
    %c0_42 = arith.constant 0 : index
    %c0_43 = arith.constant 0 : index
    %94 = vector.load %arg2[%c2_41, %c0_42, %c0_43] : memref<4x1x128xf32, #tpu.memory_space<vmem>>, vector<1x1x128xf32>
    %95 = vector.shape_cast %94 : vector<1x1x128xf32> to vector<1x128xf32>
    %cst_44 = arith.constant 9.99999974E-6 : f32
    %96 = vector.broadcast %cst_44 : f32 to vector<1x128xf32>
    %97 = arith.addf %93, %96 : vector<1x128xf32>
    %98 = math.rsqrt %97 : vector<1x128xf32>
    %99 = arith.mulf %95, %98 : vector<1x128xf32>
    %c2_45 = arith.constant 2 : index
    %c0_46 = arith.constant 0 : index
    %c0_47 = arith.constant 0 : index
    %100 = vector.load %arg3[%c2_45, %c0_46, %c0_47] : memref<4x1x128xf32, #tpu.memory_space<vmem>>, vector<1x1x128xf32>
    %101 = vector.shape_cast %100 : vector<1x1x128xf32> to vector<1x128xf32>
    %102 = arith.mulf %84, %99 : vector<1x128xf32>
    %103 = arith.subf %101, %102 : vector<1x128xf32>
    %104 = vector.broadcast %99 : vector<1x128xf32> to vector<8x128xf32>
    %105 = arith.mulf %80, %104 : vector<8x128xf32>
    %106 = vector.broadcast %103 : vector<1x128xf32> to vector<8x128xf32>
    %107 = arith.addf %105, %106 : vector<8x128xf32>
    %cst_48 = arith.constant 0.000000e+00 : f32
    %108 = vector.broadcast %cst_48 : f32 to vector<8x128xf32>
    %109 = arith.maximumf %107, %108 : vector<8x128xf32>
    %110 = vector.broadcast %4 : vector<8x1xf32> to vector<8x128xf32>
    %111 = arith.mulf %109, %110 : vector<8x128xf32>
    %112 = arith.truncf %111 : vector<8x128xf32> to vector<8x128xbf16>
    %c3 = arith.constant 3 : index
    %c0_49 = arith.constant 0 : index
    %c0_50 = arith.constant 0 : index
    %113 = vector.load %arg1[%c3, %c0_49, %c0_50] : memref<4x128x128xbf16, #tpu.memory_space<vmem>>, vector<1x128x128xbf16>
    %114 = vector.shape_cast %113 : vector<1x128x128xbf16> to vector<128x128xbf16>
    %cst_51 = arith.constant dense<0.000000e+00> : vector<8x128xf32>
    %115 = tpu.matmul %112, %114, %cst_51 {dimension_numbers = #tpu.dot_dimension_numbers<[1], [0], [0], [1], [0, 0, 1, 1], [], []>} : vector<8x128xbf16>, vector<128x128xbf16>, vector<8x128xf32> -> vector<8x128xf32>
    %cst_52 = arith.constant dense<0.000000e+00> : vector<128xf32>
    %116 = vector.multi_reduction <add>, %115, %cst_52 [0] : vector<8x128xf32> to vector<128xf32>
    %117 = vector.shape_cast %116 : vector<128xf32> to vector<1x128xf32>
    %cst_53 = arith.constant 1.250000e-01 : f32
    %118 = vector.broadcast %cst_53 : f32 to vector<1x128xf32>
    %119 = arith.mulf %117, %118 : vector<1x128xf32>
    %120 = arith.mulf %115, %115 : vector<8x128xf32>
    %cst_54 = arith.constant dense<0.000000e+00> : vector<128xf32>
    %121 = vector.multi_reduction <add>, %120, %cst_54 [0] : vector<8x128xf32> to vector<128xf32>
    %122 = vector.shape_cast %121 : vector<128xf32> to vector<1x128xf32>
    %cst_55 = arith.constant 1.250000e-01 : f32
    %123 = vector.broadcast %cst_55 : f32 to vector<1x128xf32>
    %124 = arith.mulf %122, %123 : vector<1x128xf32>
    %125 = arith.mulf %119, %119 : vector<1x128xf32>
    %126 = arith.subf %124, %125 : vector<1x128xf32>
    %cst_56 = arith.constant 0.000000e+00 : f32
    %127 = vector.broadcast %cst_56 : f32 to vector<1x128xf32>
    %128 = arith.maximumf %126, %127 : vector<1x128xf32>
    %c3_57 = arith.constant 3 : index
    %c0_58 = arith.constant 0 : index
    %c0_59 = arith.constant 0 : index
    %129 = vector.load %arg2[%c3_57, %c0_58, %c0_59] : memref<4x1x128xf32, #tpu.memory_space<vmem>>, vector<1x1x128xf32>
    %130 = vector.shape_cast %129 : vector<1x1x128xf32> to vector<1x128xf32>
    %cst_60 = arith.constant 9.99999974E-6 : f32
    %131 = vector.broadcast %cst_60 : f32 to vector<1x128xf32>
    %132 = arith.addf %128, %131 : vector<1x128xf32>
    %133 = math.rsqrt %132 : vector<1x128xf32>
    %134 = arith.mulf %130, %133 : vector<1x128xf32>
    %c3_61 = arith.constant 3 : index
    %c0_62 = arith.constant 0 : index
    %c0_63 = arith.constant 0 : index
    %135 = vector.load %arg3[%c3_61, %c0_62, %c0_63] : memref<4x1x128xf32, #tpu.memory_space<vmem>>, vector<1x1x128xf32>
    %136 = vector.shape_cast %135 : vector<1x1x128xf32> to vector<1x128xf32>
    %137 = arith.mulf %119, %134 : vector<1x128xf32>
    %138 = arith.subf %136, %137 : vector<1x128xf32>
    %139 = vector.broadcast %134 : vector<1x128xf32> to vector<8x128xf32>
    %140 = arith.mulf %115, %139 : vector<8x128xf32>
    %141 = vector.broadcast %138 : vector<1x128xf32> to vector<8x128xf32>
    %142 = arith.addf %140, %141 : vector<8x128xf32>
    %143 = arith.addf %142, %76 : vector<8x128xf32>
    %cst_64 = arith.constant 0.000000e+00 : f32
    %144 = vector.broadcast %cst_64 : f32 to vector<8x128xf32>
    %145 = arith.maximumf %143, %144 : vector<8x128xf32>
    %146 = vector.broadcast %4 : vector<8x1xf32> to vector<8x128xf32>
    %147 = arith.mulf %145, %146 : vector<8x128xf32>
    %c0_65 = arith.constant 0 : index
    %c0_66 = arith.constant 0 : index
    %148 = vector.load %arg4[%c0_65, %c0_66] : memref<8x128xf32, #tpu.memory_space<vmem>>, vector<8x128xf32>
    tpu.vector_store %arg4[%c0_65, %c0_66], %147 {strides = array<i32>} : memref<8x128xf32, #tpu.memory_space<vmem>>, vector<8x128xf32>,
    return
  }
}

</mosaic_0001>

<llo_original>
// kernel: two_cascaded_res_blocks.1
$region0: #{two_cascaded_res_blocks.1}
  #allocation0 [shape = 'u32[]', space=smem, size = 0x4, offset = 0x4, fixed_abs, tag = 'smem constant byte address 0x4 - core index']
  #allocation1 [shape = 'u32[72,128]{1,0:T(1,128)}', space=vmem, size = 0x9000, scoped, tag = 'internal scratch']
  %s0 = inlined_call_operand.vmem [shape: f32[8,128], index: 0, kind: input, shape index: {}]
  %s1 = inlined_call_operand.hbm [shape: bf16[4,128,128], index: 1, kind: input, shape index: {}]
  %s2 = inlined_call_operand.vmem [shape: f32[4,1,128], index: 2, kind: input, shape index: {}]
  %s3 = inlined_call_operand.vmem [shape: f32[4,1,128], index: 3, kind: input, shape index: {}]
  %s4 = inlined_call_operand.hbm [shape: f32[8,128], index: 4, kind: output, shape index: {}]
  %s5 = sld [smem:[#allocation0]]
  $region30: #{two_cascaded_res_blocks.1} parent=0
    _
  %s7 = ssub.s32 1, %s5
  %s8 = scalar_select 0, %s7, %s5
  $region1: #{two_cascaded_res_blocks.1} parent=0
    #allocation2 [shape = 'u8[131072]{0}', space=vmem, size = 0x20000, scoped, tag = 'input window, operand 1, single buffered']
    #allocation3 [shape = 's32[1]{0}', space=sflag, size = 0x4, scoped, tag = 'scoped memory for two_cascaded_res_blocks.1']
    #allocation4 [shape = 's32[1]{0}', space=sflag, size = 0x4, scoped, tag = 'scoped memory for two_cascaded_res_blocks.1']
    #allocation5 [shape = 'u8[4096]{0}', space=vmem, size = 0x1000, scoped, tag = 'output window, operand 0, single buffered']
    %9 = vsyncpa [#allocation3], 0
    %10 = vsyncpa [#allocation4], 0
    // Predicated region
    $region2: #{two_cascaded_res_blocks.1} parent=1 // pred_check
      _
    $region3: #{two_cascaded_res_blocks.1} parent=1 // pred_check_branch
      %12 = sbr.rel (0) target = $region5
    $region4: #{two_cascaded_res_blocks.1} parent=1 // pred_region
      _
    $region5: #{two_cascaded_res_blocks.1} parent=1 // pred_fallthru
      _
    // Predicated region
    $region6: #{two_cascaded_res_blocks.1} parent=1 // pred_check
      _
    $region7: #{two_cascaded_res_blocks.1} parent=1 // pred_check_branch
      %14 = sbr.rel (0) target = $region9
    $region8: #{two_cascaded_res_blocks.1} parent=1 // pred_region
      %16 = vsyncadd [#allocation3], 0
      %s17 = sshll.u32 %s1, 4
      %s18 = int_to_ptr.hbm [resolvable:$true] %s17
      %s19 = sshll.u32 [#allocation2], 4
      %s20 = int_to_ptr.vmem [resolvable:$true] %s19
      %25 = dma.hbm_to_vmem [thread:$0]  %s18, 4096, %s20, [#allocation3], 64, 64, 4
    $region9: #{two_cascaded_res_blocks.1} parent=1 // pred_fallthru
      _
    // Predicated region
    $region10: #{two_cascaded_res_blocks.1} parent=1 // pred_check
      _
    $region11: #{two_cascaded_res_blocks.1} parent=1 // pred_check_branch
      %27 = sbr.rel (0) target = $region13
    $region12: #{two_cascaded_res_blocks.1} parent=1 // pred_region
      _
    $region13: #{two_cascaded_res_blocks.1} parent=1 // pred_fallthru
      _
    // Predicated region
    $region14: #{two_cascaded_res_blocks.1} parent=1 // pred_check
      _
    $region15: #{two_cascaded_res_blocks.1} parent=1 // pred_check_branch
      %29 = sbr.rel (0) target = $region17
    $region16: #{two_cascaded_res_blocks.1} parent=1 // pred_region
      _
    $region17: #{two_cascaded_res_blocks.1} parent=1 // pred_fallthru
      _
    // Predicated region
    $region18: #{two_cascaded_res_blocks.1} parent=1 // pred_check
      _
    $region19: #{two_cascaded_res_blocks.1} parent=1 // pred_check_branch
      %31 = sbr.rel (0) target = $region21
    $region20: #{two_cascaded_res_blocks.1} parent=1 // pred_region
      %33 = dma.done [#allocation3], 4096
    $region21: #{two_cascaded_res_blocks.1} parent=1 // pred_fallthru
      _
    %v34 = vlaneseq
    %v35 = vshrl.u32 %v34, 7
    %vm36 = vcmp.lt.s32.totalorder %v35, 8
    %v37 = vsel %vm36, 1, 0
    %v38 = vcvt.s32.f32 %v37
    %v39 = vld [vmem:[%s0] sm:$0xff]
    %v40 = vpack.c.bf16 %v39, %v39
    %v41 = vld [vmem:[#allocation2] sm:$0xf]
    %v42 = vld [vmem:[#allocation2 + $0x4] sm:$0xf]
    %v43 = vld [vmem:[#allocation2 + $0x8] sm:$0xf]
    %v44 = vld [vmem:[#allocation2 + $0xc] sm:$0xf]
    %v45 = vld [vmem:[#allocation2 + $0x10] sm:$0xf]
    %v46 = vld [vmem:[#allocation2 + $0x14] sm:$0xf]
    %v47 = vld [vmem:[#allocation2 + $0x18] sm:$0xf]
    %v48 = vld [vmem:[#allocation2 + $0x1c] sm:$0xf]
    %v49 = vld [vmem:[#allocation2 + $0x20] sm:$0xf]
    %v50 = vld [vmem:[#allocation2 + $0x24] sm:$0xf]
    %v51 = vld [vmem:[#allocation2 + $0x28] sm:$0xf]
    %v52 = vld [vmem:[#allocation2 + $0x2c] sm:$0xf]
    %v53 = vld [vmem:[#allocation2 + $0x30] sm:$0xf]
    %v54 = vld [vmem:[#allocation2 + $0x34] sm:$0xf]
    %v55 = vld [vmem:[#allocation2 + $0x38] sm:$0xf]
    %v56 = vld [vmem:[#allocation2 + $0x3c] sm:$0xf]
    %v73 = vunpack.c.l.b16 %v41
    %v74 = vunpack.c.l.b16 %v42
    %v75 = vunpack.c.l.b16 %v43
    %v76 = vunpack.c.l.b16 %v44
    %v77 = vunpack.c.l.b16 %v45
    %v78 = vunpack.c.l.b16 %v46
    %v79 = vunpack.c.l.b16 %v47
    %v80 = vunpack.c.l.b16 %v48
    %v81 = vunpack.c.l.b16 %v49
    %v82 = vunpack.c.l.b16 %v50
    %v83 = vunpack.c.l.b16 %v51
    %v84 = vunpack.c.l.b16 %v52
    %v85 = vunpack.c.l.b16 %v53
    %v86 = vunpack.c.l.b16 %v54
    %v87 = vunpack.c.l.b16 %v55
    %v88 = vunpack.c.l.b16 %v56
    %v89 = vpack.c.b16 %v74, %v73
    %v90 = vpack.c.b16 %v76, %v75
    %v91 = vpack.c.b16 %v78, %v77
    %v92 = vpack.c.b16 %v80, %v79
    %v93 = vpack.c.b16 %v82, %v81
    %v94 = vpack.c.b16 %v84, %v83
    %v95 = vpack.c.b16 %v86, %v85
    %v96 = vpack.c.b16 %v88, %v87
    %105 = vmatpush.bf16.msra.mxu0 %v96
    %106 = vmatpush.bf16.msra.mxu0 %v95
    %107 = vmatpush.bf16.msra.mxu0 %v94
    %108 = vmatpush.bf16.msra.mxu0 %v93
    %109 = vmatpush.bf16.msra.mxu0 %v92
    %110 = vmatpush.bf16.msra.mxu0 %v91
    %111 = vmatpush.bf16.msra.mxu0 %v90
    %112 = vmatpush.bf16.msra.mxu0 %v89
    %113 = vmatmul.bf16.gmra.mxu0 %v40
    %v114 = vpop.f32.mrf.mxu0
    %v115 = vadd.f32 0.0, %v114
    %v116 = vpop.f32.mrf.mxu0
    %117 = vdwg.mxu0
    %v118 = vrot.slane %v115, 4
    %v119 = vadd.f32 %v115, %v118
    %v120 = vrot.slane %v119, 2
    %v121 = vadd.f32 %v119, %v120
    %v122 = vrot.slane %v121, 1
    %v123 = vadd.f32 %v121, %v122
    %v124 = vmul.f32 %v123, 0.125
    %v125 = vmul.f32 %v115, %v115
    %v126 = vrot.slane %v125, 4
    %v127 = vadd.f32 %v125, %v126
    %v128 = vrot.slane %v127, 2
    %v129 = vadd.f32 %v127, %v128
    %v130 = vrot.slane %v129, 1
    %v131 = vadd.f32 %v129, %v130
    %v132 = vmul.f32 %v131, 0.125
    %v133 = vmul.f32 %v124, %v124
    %v134 = vsub.f32 %v132, %v133
    %v135 = vmax.f32 %v134, 0.0
    %v136 = vld [vmem:[%s2] sm:$0x1]
    %v137 = vadd.f32 %v135, 1e-05
    %v138 = vrsqrt.pop %v137
    %v139 = vmul.f32 %v138, %v137
    %v140 = vmul.f32 %v139, %v138
    %v141 = vmul.f32 0.5, %v140
    %v142 = vsub.f32 1.5, %v141
    %v143 = vmul.f32 %v138, %v142
    %vm144 = vweird.f32 %v137
    %vm145 = vweird.f32 %v138
    %vm146 = vmor %vm144, %vm145
    %v147 = vsel %vm146, %v138, %v143
    %v148 = vmul.f32 %v136, %v147
    %v149 = vld [vmem:[%s3] sm:$0x1]
    %v150 = vmul.f32 %v124, %v148
    %v151 = vsub.f32 %v149, %v150
    %v153 = vperm.slane %v148, 0
    %v155 = vmul.f32 %v115, %v153
    %v157 = vperm.slane %v151, 0
    %v159 = vadd.f32 %v155, %v157
    %v160 = vmax.f32 %v159, 0.0
    %v161 = vmul.f32 %v160, %v38
    %v162 = vpack.c.bf16 %v161, %v161
    %s163 = scalar_lea.vmem [#allocation2], 64
    %v164 = vld [vmem:[%s163] sm:$0xf]
    %v165 = vld [vmem:[%s163 + $0x4] sm:$0xf]
    %v166 = vld [vmem:[%s163 + $0x8] sm:$0xf]
    %v167 = vld [vmem:[%s163 + $0xc] sm:$0xf]
    %v168 = vld [vmem:[%s163 + $0x10] sm:$0xf]
    %v169 = vld [vmem:[%s163 + $0x14] sm:$0xf]
    %v170 = vld [vmem:[%s163 + $0x18] sm:$0xf]
    %v171 = vld [vmem:[%s163 + $0x1c] sm:$0xf]
    %v172 = vld [vmem:[%s163 + $0x20] sm:$0xf]
    %v173 = vld [vmem:[%s163 + $0x24] sm:$0xf]
    %v174 = vld [vmem:[%s163 + $0x28] sm:$0xf]
    %v175 = vld [vmem:[%s163 + $0x2c] sm:$0xf]
    %v176 = vld [vmem:[%s163 + $0x30] sm:$0xf]
    %v177 = vld [vmem:[%s163 + $0x34] sm:$0xf]
    %v178 = vld [vmem:[%s163 + $0x38] sm:$0xf]
    %v179 = vld [vmem:[%s163 + $0x3c] sm:$0xf]
    %v196 = vunpack.c.l.b16 %v164
    %v197 = vunpack.c.l.b16 %v165
    %v198 = vunpack.c.l.b16 %v166
    %v199 = vunpack.c.l.b16 %v167
    %v200 = vunpack.c.l.b16 %v168
    %v201 = vunpack.c.l.b16 %v169
    %v202 = vunpack.c.l.b16 %v170
    %v203 = vunpack.c.l.b16 %v171
    %v204 = vunpack.c.l.b16 %v172
    %v205 = vunpack.c.l.b16 %v173
    %v206 = vunpack.c.l.b16 %v174
    %v207 = vunpack.c.l.b16 %v175
    %v208 = vunpack.c.l.b16 %v176
    %v209 = vunpack.c.l.b16 %v177
    %v210 = vunpack.c.l.b16 %v178
    %v211 = vunpack.c.l.b16 %v179
    %v212 = vpack.c.b16 %v197, %v196
    %v213 = vpack.c.b16 %v199, %v198
    %v214 = vpack.c.b16 %v201, %v200
    %v215 = vpack.c.b16 %v203, %v202
    %v216 = vpack.c.b16 %v205, %v204
    %v217 = vpack.c.b16 %v207, %v206
    %v218 = vpack.c.b16 %v209, %v208
    %v219 = vpack.c.b16 %v211, %v210
    %228 = vmatpush.bf16.msra.mxu0 %v219
    %229 = vmatpush.bf16.msra.mxu0 %v218
    %230 = vmatpush.bf16.msra.mxu0 %v217
    %231 = vmatpush.bf16.msra.mxu0 %v216
    %232 = vmatpush.bf16.msra.mxu0 %v215
    %233 = vmatpush.bf16.msra.mxu0 %v214
    %234 = vmatpush.bf16.msra.mxu0 %v213
    %235 = vmatpush.bf16.msra.mxu0 %v212
    %236 = vmatmul.bf16.gmra.mxu0 %v162
    %v237 = vpop.f32.mrf.mxu0
    %v238 = vadd.f32 0.0, %v237
    %v239 = vpop.f32.mrf.mxu0
    %240 = vdwg.mxu0
    %v241 = vrot.slane %v238, 4
    %v242 = vadd.f32 %v238, %v241
    %v243 = vrot.slane %v242, 2
    %v244 = vadd.f32 %v242, %v243
    %v245 = vrot.slane %v244, 1
    %v246 = vadd.f32 %v244, %v245
    %v247 = vmul.f32 %v246, 0.125
    %v248 = vmul.f32 %v238, %v238
    %v249 = vrot.slane %v248, 4
    %v250 = vadd.f32 %v248, %v249
    %v251 = vrot.slane %v250, 2
    %v252 = vadd.f32 %v250, %v251
    %v253 = vrot.slane %v252, 1
    %v254 = vadd.f32 %v252, %v253
    %v255 = vmul.f32 %v254, 0.125
    %v256 = vmul.f32 %v247, %v247
    %v257 = vsub.f32 %v255, %v256
    %v258 = vmax.f32 %v257, 0.0
    %s259 = scalar_lea.vmem %s2, 1
    %v260 = vld [vmem:[%s259] sm:$0x1]
    %v261 = vadd.f32 %v258, 1e-05
    %v262 = vrsqrt.pop %v261
    %v263 = vmul.f32 %v262, %v261
    %v264 = vmul.f32 %v263, %v262
    %v265 = vmul.f32 0.5, %v264
    %v266 = vsub.f32 1.5, %v265
    %v267 = vmul.f32 %v262, %v266
    %vm268 = vweird.f32 %v261
    %vm269 = vweird.f32 %v262
    %vm270 = vmor %vm268, %vm269
    %v271 = vsel %vm270, %v262, %v267
    %v272 = vmul.f32 %v260, %v271
    %s273 = scalar_lea.vmem %s3, 1
    %v274 = vld [vmem:[%s273] sm:$0x1]
    %v275 = vmul.f32 %v247, %v272
    %v276 = vsub.f32 %v274, %v275
    %v278 = vperm.slane %v272, 0
    %v280 = vmul.f32 %v238, %v278
    %v282 = vperm.slane %v276, 0
    %v284 = vadd.f32 %v280, %v282
    %v285 = vadd.f32 %v284, %v39
    %v286 = vmax.f32 %v285, 0.0
    %v287 = vmul.f32 %v286, %v38
    %v288 = vpack.c.bf16 %v287, %v287
    %s289 = scalar_lea.vmem [#allocation2], 128
    %v290 = vld [vmem:[%s289] sm:$0xf]
    %v291 = vld [vmem:[%s289 + $0x4] sm:$0xf]
    %v292 = vld [vmem:[%s289 + $0x8] sm:$0xf]
    %v293 = vld [vmem:[%s289 + $0xc] sm:$0xf]
    %v294 = vld [vmem:[%s289 + $0x10] sm:$0xf]
    %v295 = vld [vmem:[%s289 + $0x14] sm:$0xf]
    %v296 = vld [vmem:[%s289 + $0x18] sm:$0xf]
    %v297 = vld [vmem:[%s289 + $0x1c] sm:$0xf]
    %v298 = vld [vmem:[%s289 + $0x20] sm:$0xf]
    %v299 = vld [vmem:[%s289 + $0x24] sm:$0xf]
    %v300 = vld [vmem:[%s289 + $0x28] sm:$0xf]
    %v301 = vld [vmem:[%s289 + $0x2c] sm:$0xf]
    %v302 = vld [vmem:[%s289 + $0x30] sm:$0xf]
    %v303 = vld [vmem:[%s289 + $0x34] sm:$0xf]
    %v304 = vld [vmem:[%s289 + $0x38] sm:$0xf]
    %v305 = vld [vmem:[%s289 + $0x3c] sm:$0xf]
    %v322 = vunpack.c.l.b16 %v290
    %v323 = vunpack.c.l.b16 %v291
    %v324 = vunpack.c.l.b16 %v292
    %v325 = vunpack.c.l.b16 %v293
    %v326 = vunpack.c.l.b16 %v294
    %v327 = vunpack.c.l.b16 %v295
    %v328 = vunpack.c.l.b16 %v296
    %v329 = vunpack.c.l.b16 %v297
    %v330 = vunpack.c.l.b16 %v298
    %v331 = vunpack.c.l.b16 %v299
    %v332 = vunpack.c.l.b16 %v300
    %v333 = vunpack.c.l.b16 %v301
    %v334 = vunpack.c.l.b16 %v302
    %v335 = vunpack.c.l.b16 %v303
    %v336 = vunpack.c.l.b16 %v304
    %v337 = vunpack.c.l.b16 %v305
    %v338 = vpack.c.b16 %v323, %v322
    %v339 = vpack.c.b16 %v325, %v324
    %v340 = vpack.c.b16 %v327, %v326
    %v341 = vpack.c.b16 %v329, %v328
    %v342 = vpack.c.b16 %v331, %v330
    %v343 = vpack.c.b16 %v333, %v332
    %v344 = vpack.c.b16 %v335, %v334
    %v345 = vpack.c.b16 %v337, %v336
    %354 = vmatpush.bf16.msra.mxu0 %v345
    %355 = vmatpush.bf16.msra.mxu0 %v344
    %356 = vmatpush.bf16.msra.mxu0 %v343
    %357 = vmatpush.bf16.msra.mxu0 %v342
    %358 = vmatpush.bf16.msra.mxu0 %v341
    %359 = vmatpush.bf16.msra.mxu0 %v340
    %360 = vmatpush.bf16.msra.mxu0 %v339
    %361 = vmatpush.bf16.msra.mxu0 %v338
    %362 = vmatmul.bf16.gmra.mxu0 %v288
    %v363 = vpop.f32.mrf.mxu0
    %v364 = vadd.f32 0.0, %v363
    %v365 = vpop.f32.mrf.mxu0
    %366 = vdwg.mxu0
    %v367 = vrot.slane %v364, 4
    %v368 = vadd.f32 %v364, %v367
    %v369 = vrot.slane %v368, 2
    %v370 = vadd.f32 %v368, %v369
    %v371 = vrot.slane %v370, 1
    %v372 = vadd.f32 %v370, %v371
    %v373 = vmul.f32 %v372, 0.125
    %v374 = vmul.f32 %v364, %v364
    %v375 = vrot.slane %v374, 4
    %v376 = vadd.f32 %v374, %v375
    %v377 = vrot.slane %v376, 2
    %v378 = vadd.f32 %v376, %v377
    %v379 = vrot.slane %v378, 1
    %v380 = vadd.f32 %v378, %v379
    %v381 = vmul.f32 %v380, 0.125
    %v382 = vmul.f32 %v373, %v373
    %v383 = vsub.f32 %v381, %v382
    %v384 = vmax.f32 %v383, 0.0
    %s385 = scalar_lea.vmem %s2, 2
    %v386 = vld [vmem:[%s385] sm:$0x1]
    %v387 = vadd.f32 %v384, 1e-05
    %v388 = vrsqrt.pop %v387
    %v389 = vmul.f32 %v388, %v387
    %v390 = vmul.f32 %v389, %v388
    %v391 = vmul.f32 0.5, %v390
    %v392 = vsub.f32 1.5, %v391
    %v393 = vmul.f32 %v388, %v392
    %vm394 = vweird.f32 %v387
    %vm395 = vweird.f32 %v388
    %vm396 = vmor %vm394, %vm395
    %v397 = vsel %vm396, %v388, %v393
    %v398 = vmul.f32 %v386, %v397
    %s399 = scalar_lea.vmem %s3, 2
    %v400 = vld [vmem:[%s399] sm:$0x1]
    %v401 = vmul.f32 %v373, %v398
    %v402 = vsub.f32 %v400, %v401
    %v404 = vperm.slane %v398, 0
    %v406 = vmul.f32 %v364, %v404
    %v408 = vperm.slane %v402, 0
    %v410 = vadd.f32 %v406, %v408
    %v411 = vmax.f32 %v410, 0.0
    %v412 = vmul.f32 %v411, %v38
    %v413 = vpack.c.bf16 %v412, %v412
    %s414 = scalar_lea.vmem [#allocation2], 192
    %v415 = vld [vmem:[%s414] sm:$0xf]
    %v416 = vld [vmem:[%s414 + $0x4] sm:$0xf]
    %v417 = vld [vmem:[%s414 + $0x8] sm:$0xf]
    %v418 = vld [vmem:[%s414 + $0xc] sm:$0xf]
    %v419 = vld [vmem:[%s414 + $0x10] sm:$0xf]
    %v420 = vld [vmem:[%s414 + $0x14] sm:$0xf]
    %v421 = vld [vmem:[%s414 + $0x18] sm:$0xf]
    %v422 = vld [vmem:[%s414 + $0x1c] sm:$0xf]
    %v423 = vld [vmem:[%s414 + $0x20] sm:$0xf]
    %v424 = vld [vmem:[%s414 + $0x24] sm:$0xf]
    %v425 = vld [vmem:[%s414 + $0x28] sm:$0xf]
    %v426 = vld [vmem:[%s414 + $0x2c] sm:$0xf]
    %v427 = vld [vmem:[%s414 + $0x30] sm:$0xf]
    %v428 = vld [vmem:[%s414 + $0x34] sm:$0xf]
    %v429 = vld [vmem:[%s414 + $0x38] sm:$0xf]
    %v430 = vld [vmem:[%s414 + $0x3c] sm:$0xf]
    %v447 = vunpack.c.l.b16 %v415
    %v448 = vunpack.c.l.b16 %v416
    %v449 = vunpack.c.l.b16 %v417
    %v450 = vunpack.c.l.b16 %v418
    %v451 = vunpack.c.l.b16 %v419
    %v452 = vunpack.c.l.b16 %v420
    %v453 = vunpack.c.l.b16 %v421
    %v454 = vunpack.c.l.b16 %v422
    %v455 = vunpack.c.l.b16 %v423
    %v456 = vunpack.c.l.b16 %v424
    %v457 = vunpack.c.l.b16 %v425
    %v458 = vunpack.c.l.b16 %v426
    %v459 = vunpack.c.l.b16 %v427
    %v460 = vunpack.c.l.b16 %v428
    %v461 = vunpack.c.l.b16 %v429
    %v462 = vunpack.c.l.b16 %v430
    %v463 = vpack.c.b16 %v448, %v447
    %v464 = vpack.c.b16 %v450, %v449
    %v465 = vpack.c.b16 %v452, %v451
    %v466 = vpack.c.b16 %v454, %v453
    %v467 = vpack.c.b16 %v456, %v455
    %v468 = vpack.c.b16 %v458, %v457
    %v469 = vpack.c.b16 %v460, %v459
    %v470 = vpack.c.b16 %v462, %v461
    %479 = vmatpush.bf16.msra.mxu0 %v470
    %480 = vmatpush.bf16.msra.mxu0 %v469
    %481 = vmatpush.bf16.msra.mxu0 %v468
    %482 = vmatpush.bf16.msra.mxu0 %v467
    %483 = vmatpush.bf16.msra.mxu0 %v466
    %484 = vmatpush.bf16.msra.mxu0 %v465
    %485 = vmatpush.bf16.msra.mxu0 %v464
    %486 = vmatpush.bf16.msra.mxu0 %v463
    %487 = vmatmul.bf16.gmra.mxu0 %v413
    %v488 = vpop.f32.mrf.mxu0
    %v489 = vadd.f32 0.0, %v488
    %v490 = vpop.f32.mrf.mxu0
    %491 = vdwg.mxu0
    %v492 = vrot.slane %v489, 4
    %v493 = vadd.f32 %v489, %v492
    %v494 = vrot.slane %v493, 2
    %v495 = vadd.f32 %v493, %v494
    %v496 = vrot.slane %v495, 1
    %v497 = vadd.f32 %v495, %v496
    %v498 = vmul.f32 %v497, 0.125
    %v499 = vmul.f32 %v489, %v489
    %v500 = vrot.slane %v499, 4
    %v501 = vadd.f32 %v499, %v500
    %v502 = vrot.slane %v501, 2
    %v503 = vadd.f32 %v501, %v502
    %v504 = vrot.slane %v503, 1
    %v505 = vadd.f32 %v503, %v504
    %v506 = vmul.f32 %v505, 0.125
    %v507 = vmul.f32 %v498, %v498
    %v508 = vsub.f32 %v506, %v507
    %v509 = vmax.f32 %v508, 0.0
    %s510 = scalar_lea.vmem %s2, 3
    %v511 = vld [vmem:[%s510] sm:$0x1]
    %v512 = vadd.f32 %v509, 1e-05
    %v513 = vrsqrt.pop %v512
    %v514 = vmul.f32 %v513, %v512
    %v515 = vmul.f32 %v514, %v513
    %v516 = vmul.f32 0.5, %v515
    %v517 = vsub.f32 1.5, %v516
    %v518 = vmul.f32 %v513, %v517
    %vm519 = vweird.f32 %v512
    %vm520 = vweird.f32 %v513
    %vm521 = vmor %vm519, %vm520
    %v522 = vsel %vm521, %v513, %v518
    %v523 = vmul.f32 %v511, %v522
    %s524 = scalar_lea.vmem %s3, 3
    %v525 = vld [vmem:[%s524] sm:$0x1]
    %v526 = vmul.f32 %v498, %v523
    %v527 = vsub.f32 %v525, %v526
    %v529 = vperm.slane %v523, 0
    %v531 = vmul.f32 %v489, %v529
    %v533 = vperm.slane %v527, 0
    %v535 = vadd.f32 %v531, %v533
    %v536 = vadd.f32 %v535, %v287
    %v537 = vmax.f32 %v536, 0.0
    %v538 = vmul.f32 %v537, %v38
    %539 = vst [vmem:[#allocation5] sm:$0xff] %v538
    // Predicated region
    $region22: #{two_cascaded_res_blocks.1} parent=1 // pred_check
      _
    $region23: #{two_cascaded_res_blocks.1} parent=1 // pred_check_branch
      %541 = sbr.rel (0) target = $region25
    $region24: #{two_cascaded_res_blocks.1} parent=1 // pred_region
      %543 = vsyncadd [#allocation4], 0
      %s545 = sshll.u32 [#allocation5], 4
      %s546 = int_to_ptr.vmem [resolvable:$true] %s545
      %s547 = sshll.u32 %s4, 4
      %s548 = int_to_ptr.hbm [resolvable:$true] %s547
      %550 = dma.vmem_to_hbm [thread:$0]  %s546, 128, %s548, [#allocation4]
    $region25: #{two_cascaded_res_blocks.1} parent=1 // pred_fallthru
      _
    // Predicated region
    $region26: #{two_cascaded_res_blocks.1} parent=1 // pred_check
      _
    $region27: #{two_cascaded_res_blocks.1} parent=1 // pred_check_branch
      %552 = sbr.rel (0) target = $region29
    $region28: #{two_cascaded_res_blocks.1} parent=1 // pred_region
      %554 = dma.done [#allocation4], 128
    $region29: #{two_cascaded_res_blocks.1} parent=1 // pred_fallthru
      _
    %555 = vsyncpa [#allocation3], 1
    %556 = vsyncpa [#allocation4], 1

</llo_original>
